<compile_context>
chip_gen: v7x
topology: tpu7x:2x2x1
jax: 0.10.0
libtpu: 0.0.40
codegen_flags: <defaults>
</compile_context>

<pallas_src>
import functools
from typing import NamedTuple, Tuple

import jax
import jax.numpy as jnp
import numpy as np
from jax.experimental import pallas as pl
from jax.experimental.pallas import tpu as pltpu  # noqa: F401


class PackMeta(NamedTuple):
    layer_dims: Tuple[Tuple[int, int], ...]   # (din, dout) per conv layer
    layer_woffs: Tuple[int, ...]              # row offset of each conv weight in w_blob
    pred_woff: int                            # row offset of w_pred in w_blob
    pred_in: int
    label_dim: int


# ------------------------------------------------------------ fused kernel
def _fused_kernel(adj_ref, x_ref, w_ref, b_ref, out_ref, *,
                  B, N, meta, use_bn, mxu_dtype):
    """Whole GConvModule forward in one grid-less call.

    Activations stay VMEM/vreg resident; parameters arrive as two packed blobs
    and are unpacked with static slices.
    """
    f32 = jnp.float32
    L = meta.label_dim
    num_layers = len(meta.layer_dims)
    adj = adj_ref[...]                                   # [BN, BN], mxu_dtype

    def mm(a, b):
        # MXU operands in mxu_dtype (bf16 on v5e/v6e/v7x fast path), f32 accumulate.
        return jnp.dot(a.astype(mxu_dtype), b.astype(mxu_dtype),
                       preferred_element_type=f32)

    def gconv(h, li, relu):
        din, dout = meta.layer_dims[li]
        woff = meta.layer_woffs[li]
        w = w_ref[woff:woff + din, 0:dout]               # static slice, mxu_dtype
        bias = b_ref[li:li + 1, 0:dout]                  # f32 [1, dout]
        # Cheaper contraction order: run the [BN,BN] aggregation at the
        # narrower feature width (exact by matmul associativity).
        if dout <= din:
            y = mm(adj, mm(h, w))
        else:
            y = mm(mm(adj, h), w)
        y = y + bias                                     # single fused add
        return jnp.maximum(y, 0.0) if relu else y

    def batchnorm(h):
        # apply_bn quirk: fresh BatchNorm1d(N) in train mode -> per-node batch
        # statistics over (batch, feature), gamma=1, beta=0, eps=1e-5, biased var.
        dout = h.shape[1]
        inv = 1.0 / (B * dout)
        s = h[0:N, :]
        for b in range(1, B):                            # static unroll over batch
            s = s + h[b * N:(b + 1) * N, :]
        mean = jnp.sum(s, axis=1, keepdims=True) * inv   # [N, 1]
        c = h - jnp.concatenate([mean] * B, axis=0)      # center (broadcast per node)
        c2 = c * c
        v = c2[0:N, :]
        for b in range(1, B):
            v = v + c2[b * N:(b + 1) * N, :]
        var = jnp.sum(v, axis=1, keepdims=True) * inv    # [N, 1]
        scale = jax.lax.rsqrt(var + 1e-5)
        return c * jnp.concatenate([scale] * B, axis=0)

    def head(h, off):
        # concat(x_all, -1) @ w_pred == sum_l x_l @ w_pred[off_l:off_l+d_l, :]
        d = h.shape[1]
        wp = w_ref[meta.pred_woff + off:meta.pred_woff + off + d, 0:L]
        return mm(h, wp)

    # conv_first + relu (+ bn)
    h = gconv(x_ref[...], 0, relu=True)
    if use_bn:
        h = batchnorm(h)
    ypred = head(h, 0)                                   # init ypred: no zeros-fill
    off = meta.layer_dims[0][1]

    # conv_block layers + relu (+ bn)
    # TODO(synk): switch to stacked [num_block,H,H] weights + lax.fori_loop if
    # num_block grows large (static unroll is fine at num_block<=2).
    for li in range(1, num_layers - 1):
        h = gconv(h, li, relu=True)
        if use_bn:
            h = batchnorm(h)
        ypred = ypred + head(h, off)
        off += meta.layer_dims[li][1]

    # conv_last (no relu, no bn)
    h = gconv(h, num_layers - 1, relu=False)
    ypred = ypred + head(h, off)

    # single prediction-head bias add
    b_pred = b_ref[num_layers:num_layers + 1, 0:L]
    out_ref[...] = (ypred + b_pred).astype(out_ref.dtype)


# ------------------------------------------------------------ param packing
def pack_params(params):
    """Pack all weights into one 2-D f32 blob (segments sublane-aligned) and
    all biases into one small 2-D f32 blob. Done once, outside the hot path."""
    ws = [params["w_first"]] + [w for (w, _) in params["block"]] \
        + [params["w_last"], params["w_pred"]]
    bs = [params["b_first"]] + [b for (_, b) in params["block"]] \
        + [params["b_last"], params["b_pred"]]
    max_out = max(int(w.shape[1]) for w in ws)
    ALIGN = 32                                           # covers f32/bf16 sublane tiling

    segs, offs, off = [], [], 0
    for w in ws:
        din, dout = int(w.shape[0]), int(w.shape[1])
        rows = -(-din // ALIGN) * ALIGN
        seg = jnp.zeros((rows, max_out), jnp.float32).at[:din, :dout].set(
            w.astype(jnp.float32))
        segs.append(seg)
        offs.append(off)
        off += rows
    w_blob = jnp.concatenate(segs, axis=0)

    brows = []
    for b in bs:
        b2 = jnp.asarray(b, jnp.float32).reshape(1, -1)
        brows.append(jnp.zeros((1, max_out), jnp.float32).at[:, :b2.shape[1]].set(b2))
    b_blob = jnp.concatenate(brows, axis=0)              # [num_layers+1, max_out]

    conv_ws = ws[:-1]
    meta = PackMeta(
        layer_dims=tuple((int(w.shape[0]), int(w.shape[1])) for w in conv_ws),
        layer_woffs=tuple(offs[:-1]),
        pred_woff=offs[-1],
        pred_in=int(ws[-1].shape[0]),
        label_dim=int(ws[-1].shape[1]),
    )
    return w_blob, b_blob, meta


# ------------------------------------------------------------ wrapper
def gconv_module_forward(x, adj, w_blob, b_blob, meta, *, bn=True,
                         mxu_dtype=jnp.bfloat16, embedding_mask=None):
    # TODO(synk): embedding_mask path not fused (module usage passes None).
    assert embedding_mask is None, "embedding_mask not supported in fused kernel"
    B, N, din = x.shape
    BN = B * N
    L = meta.label_dim

    # Block-diagonal adjacency: one [BN,BN] dot per aggregation instead of B
    # batched [N,N] dots (exact -- off-diagonal blocks are zero).
    eye = jnp.eye(B, dtype=jnp.float32)
    adj_bd = (eye[:, None, :, None] * adj.astype(jnp.float32)[:, :, None, :])
    adj_bd = adj_bd.reshape(BN, BN).astype(mxu_dtype)

    x2d = x.reshape(BN, din).astype(jnp.float32)
    w_in = w_blob.astype(mxu_dtype)                      # MXU-only operand
    b_in = b_blob.astype(jnp.float32)                    # epilogue stays f32
    inputs = [adj_bd, x2d, w_in, b_in]

    # Grid-less fused call requires everything VMEM-resident; crude guard.
    in_bytes = sum(int(a.size) * a.dtype.itemsize for a in inputs)
    max_feat = max([d for _, d in meta.layer_dims] + [meta.pred_in])
    if in_bytes + 6 * BN * max_feat * 4 > 96 * 1024 * 1024:
        # TODO(synk): add a tiled (grid over batch / node rows) fallback for large B*N.
        raise NotImplementedError("fused GConv kernel requires VMEM-resident buffers")

    flops = 0
    for (di, do) in meta.layer_dims:
        flops += 2 * BN * BN * min(di, do) + 2 * BN * di * do + 2 * BN * do * L
    n_bn = (len(meta.layer_dims) - 1) if bn else 0
    cost = pl.CostEstimate(flops=int(flops), transcendentals=int(n_bn * N),
                           bytes_accessed=int(in_bytes + BN * L * 4))

    def full_spec(a):
        nd = a.ndim
        return pl.BlockSpec(a.shape, lambda *_, nd=nd: (0,) * nd)

    kernel = functools.partial(_fused_kernel, B=B, N=N, meta=meta,
                               use_bn=bn, mxu_dtype=mxu_dtype)
    out2d = pl.pallas_call(
        kernel,
        out_shape=jax.ShapeDtypeStruct((BN, L), jnp.float32),
        in_specs=[full_spec(a) for a in inputs],
        out_specs=pl.BlockSpec((BN, L), lambda *_: (0, 0)),
        cost_estimate=cost,
    )(*inputs)
    return out2d.reshape(B, N, L)


# ------------------------------------------------------------ params / reference
def init_params(key, input_dim, hidden_dim, embedding_dim, label_dim, num_layers):
    keys = jax.random.split(key, 2 * (num_layers + 1))
    ki = iter(keys)

    def dense(k, din, dout):
        scale = 1.0 / jnp.sqrt(jnp.float32(din))
        return jax.random.normal(k, (din, dout), jnp.float32) * scale

    params = {}
    params["w_first"] = dense(next(ki), input_dim, hidden_dim)
    params["b_first"] = jax.random.normal(next(ki), (1, hidden_dim), jnp.float32) * 0.1
    params["block"] = []
    for _ in range(num_layers - 2):
        w = dense(next(ki), hidden_dim, hidden_dim)
        b = jax.random.normal(next(ki), (1, hidden_dim), jnp.float32) * 0.1
        params["block"].append((w, b))
    params["w_last"] = dense(next(ki), hidden_dim, embedding_dim)
    params["b_last"] = jax.random.normal(next(ki), (1, embedding_dim), jnp.float32) * 0.1
    pred_input_dim = hidden_dim * (num_layers - 1) + embedding_dim
    params["w_pred"] = dense(next(ki), pred_input_dim, label_dim)
    params["b_pred"] = jax.random.normal(next(ki), (1, label_dim), jnp.float32) * 0.1
    return params


def _reference_forward(x, adj, params, *, bn=True):
    """Pure-JAX reference matching the PyTorch module (for sanity check)."""
    def gconv(h, w, b, relu):
        y = jnp.einsum('bij,bjd->bid', adj, h) @ w + b
        return jnp.maximum(y, 0.0) if relu else y

    def bnorm(h):
        mean = jnp.mean(h, axis=(0, 2), keepdims=True)
        var = jnp.mean((h - mean) ** 2, axis=(0, 2), keepdims=True)
        return (h - mean) / jnp.sqrt(var + 1e-5)

    h = gconv(x, params["w_first"], params["b_first"], True)
    if bn:
        h = bnorm(h)
    x_all = [h]
    for (w, b) in params["block"]:
        h = gconv(h, w, b, True)
        if bn:
            h = bnorm(h)
        x_all.append(h)
    h = gconv(h, params["w_last"], params["b_last"], False)
    x_all.append(h)
    x_cat = jnp.concatenate(x_all, axis=2)
    return x_cat @ params["w_pred"] + params["b_pred"]


# ------------------------------------------------------------ main
if __name__ == "__main__":
    B, N = 2, 16
    input_dim, hidden_dim, embedding_dim, label_dim, num_layers = 8, 32, 16, 4, 3

    key = jax.random.PRNGKey(0)
    k_x, k_adj, k_p = jax.random.split(key, 3)

    x = jax.random.normal(k_x, (B, N, input_dim), jnp.float32)
    adj_raw = jax.random.uniform(k_adj, (B, N, N), jnp.float32)
    adj = 0.5 * (adj_raw + jnp.transpose(adj_raw, (0, 2, 1)))   # symmetric adjacency

    params = init_params(k_p, input_dim, hidden_dim, embedding_dim,
                         label_dim, num_layers)
    w_blob, b_blob, meta = pack_params(params)

    fwd = jax.jit(gconv_module_forward,
                  static_argnames=("meta", "bn", "mxu_dtype"))

    ref = _reference_forward(x, adj, params, bn=True)

    # Exact-path check (f32 MXU operands) — tight tolerance.
    y_f32 = jax.block_until_ready(
        fwd(x, adj, w_blob, b_blob, meta=meta, bn=True, mxu_dtype=jnp.float32))
    assert y_f32.shape == (B, N, label_dim)
    assert bool(jnp.all(jnp.isfinite(y_f32)))
    np.testing.assert_allclose(np.asarray(y_f32), np.asarray(ref),
                               rtol=1e-3, atol=1e-3)

    # Fast-path check (bf16 MXU operands, f32 epilogue) — looser tolerance.
    y_bf16 = jax.block_until_ready(
        fwd(x, adj, w_blob, b_blob, meta=meta, bn=True, mxu_dtype=jnp.bfloat16))
    assert y_bf16.shape == (B, N, label_dim)
    assert bool(jnp.all(jnp.isfinite(y_bf16)))
    np.testing.assert_allclose(np.asarray(y_bf16), np.asarray(ref),
                               rtol=1e-1, atol=1e-1)

    print("KERNEL_OK")
</pallas_src>

<mosaic_0001>
module attributes {stable_mosaic.version = 11 : i64} {
  func.func @_fused_kernel(%arg0: memref<32x32xf32, #tpu.memory_space<vmem>>, %arg1: memref<32x8xf32, #tpu.memory_space<vmem>>, %arg2: memref<192x32xf32, #tpu.memory_space<vmem>>, %arg3: memref<4x32xf32, #tpu.memory_space<vmem>>, %arg4: memref<32x4xf32, #tpu.memory_space<vmem>>) attributes {dimension_semantics = [], scalar_prefetch = 0 : i64, scratch_operands = 0 : i64, tpu.core_type = #tpu.core_type<tc>} {
    %c0 = arith.constant 0 : index
    %c0_0 = arith.constant 0 : index
    %0 = vector.load %arg0[%c0, %c0_0] : memref<32x32xf32, #tpu.memory_space<vmem>>, vector<32x32xf32>
    %c0_1 = arith.constant 0 : index
    %c0_2 = arith.constant 0 : index
    %1 = vector.load %arg1[%c0_1, %c0_2] : memref<32x8xf32, #tpu.memory_space<vmem>>, vector<32x8xf32>
    %c0_3 = arith.constant 0 : index
    %c0_4 = arith.constant 0 : index
    %2 = vector.load %arg2[%c0_3, %c0_4] : memref<192x32xf32, #tpu.memory_space<vmem>>, vector<8x32xf32>
    %c0_5 = arith.constant 0 : index
    %c0_6 = arith.constant 0 : index
    %3 = vector.load %arg3[%c0_5, %c0_6] : memref<4x32xf32, #tpu.memory_space<vmem>>, vector<1x32xf32>
    %cst = arith.constant dense<0.000000e+00> : vector<32x8xf32>
    %4 = tpu.matmul %0, %1, %cst {dimension_numbers = #tpu.dot_dimension_numbers<[1], [0], [0], [1], [0, 0, 1, 1], [], []>} : vector<32x32xf32>, vector<32x8xf32>, vector<32x8xf32> -> vector<32x8xf32>
    %cst_7 = arith.constant dense<0.000000e+00> : vector<32x32xf32>
    %5 = tpu.matmul %4, %2, %cst_7 {dimension_numbers = #tpu.dot_dimension_numbers<[1], [0], [0], [1], [0, 0, 1, 1], [], []>} : vector<32x8xf32>, vector<8x32xf32>, vector<32x32xf32> -> vector<32x32xf32>
    %6 = vector.broadcast %3 : vector<1x32xf32> to vector<32x32xf32>
    %7 = arith.addf %5, %6 : vector<32x32xf32>
    %cst_8 = arith.constant 0.000000e+00 : f32
    %8 = vector.broadcast %cst_8 : f32 to vector<32x32xf32>
    %9 = arith.maximumf %7, %8 : vector<32x32xf32>
    %10 = vector.extract_strided_slice %9 {offsets = [0, 0], sizes = [16, 32], strides = [1, 1]} : vector<32x32xf32> to vector<16x32xf32>
    %11 = vector.extract_strided_slice %9 {offsets = [16, 0], sizes = [16, 32], strides = [1, 1]} : vector<32x32xf32> to vector<16x32xf32>
    %12 = arith.addf %10, %11 : vector<16x32xf32>
    %cst_9 = arith.constant dense<0.000000e+00> : vector<16xf32>
    %13 = vector.multi_reduction <add>, %12, %cst_9 [1] : vector<16x32xf32> to vector<16xf32>
    %14 = vector.shape_cast %13 : vector<16xf32> to vector<16x1xf32>
    %cst_10 = arith.constant 1.562500e-02 : f32
    %15 = vector.broadcast %cst_10 : f32 to vector<16x1xf32>
    %16 = arith.mulf %14, %15 : vector<16x1xf32>
    %17 = tpu.concatenate %16, %16 in 0 : vector<16x1xf32>, vector<16x1xf32> -> vector<32x1xf32>
    %18 = vector.broadcast %17 : vector<32x1xf32> to vector<32x32xf32>
    %19 = arith.subf %9, %18 : vector<32x32xf32>
    %20 = arith.mulf %19, %19 : vector<32x32xf32>
    %21 = vector.extract_strided_slice %20 {offsets = [0, 0], sizes = [16, 32], strides = [1, 1]} : vector<32x32xf32> to vector<16x32xf32>
    %22 = vector.extract_strided_slice %20 {offsets = [16, 0], sizes = [16, 32], strides = [1, 1]} : vector<32x32xf32> to vector<16x32xf32>
    %23 = arith.addf %21, %22 : vector<16x32xf32>
    %cst_11 = arith.constant dense<0.000000e+00> : vector<16xf32>
    %24 = vector.multi_reduction <add>, %23, %cst_11 [1] : vector<16x32xf32> to vector<16xf32>
    %25 = vector.shape_cast %24 : vector<16xf32> to vector<16x1xf32>
    %cst_12 = arith.constant 1.562500e-02 : f32
    %26 = vector.broadcast %cst_12 : f32 to vector<16x1xf32>
    %27 = arith.mulf %25, %26 : vector<16x1xf32>
    %cst_13 = arith.constant 9.99999974E-6 : f32
    %28 = vector.broadcast %cst_13 : f32 to vector<16x1xf32>
    %29 = arith.addf %27, %28 : vector<16x1xf32>
    %30 = math.rsqrt %29 : vector<16x1xf32>
    %31 = tpu.concatenate %30, %30 in 0 : vector<16x1xf32>, vector<16x1xf32> -> vector<32x1xf32>
    %32 = vector.broadcast %31 : vector<32x1xf32> to vector<32x32xf32>
    %33 = arith.mulf %19, %32 : vector<32x32xf32>
    %c96 = arith.constant 96 : index
    %c0_14 = arith.constant 0 : index
    %34 = vector.load %arg2[%c96, %c0_14] : memref<192x32xf32, #tpu.memory_space<vmem>>, vector<32x4xf32>
    %cst_15 = arith.constant dense<0.000000e+00> : vector<32x4xf32>
    %35 = tpu.matmul %33, %34, %cst_15 {dimension_numbers = #tpu.dot_dimension_numbers<[1], [0], [0], [1], [0, 0, 1, 1], [], []>} : vector<32x32xf32>, vector<32x4xf32>, vector<32x4xf32> -> vector<32x4xf32>
    %c32 = arith.constant 32 : index
    %c0_16 = arith.constant 0 : index
    %36 = vector.load %arg2[%c32, %c0_16] : memref<192x32xf32, #tpu.memory_space<vmem>>, vector<32x32xf32>
    %c1 = arith.constant 1 : index
    %c0_17 = arith.constant 0 : index
    %37 = vector.load %arg3[%c1, %c0_17] : memref<4x32xf32, #tpu.memory_space<vmem>>, vector<1x32xf32>
    %cst_18 = arith.constant dense<0.000000e+00> : vector<32x32xf32>
    %38 = tpu.matmul %33, %36, %cst_18 {dimension_numbers = #tpu.dot_dimension_numbers<[1], [0], [0], [1], [0, 0, 1, 1], [], []>} : vector<32x32xf32>, vector<32x32xf32>, vector<32x32xf32> -> vector<32x32xf32>
    %cst_19 = arith.constant dense<0.000000e+00> : vector<32x32xf32>
    %39 = tpu.matmul %0, %38, %cst_19 {dimension_numbers = #tpu.dot_dimension_numbers<[1], [0], [0], [1], [0, 0, 1, 1], [], []>} : vector<32x32xf32>, vector<32x32xf32>, vector<32x32xf32> -> vector<32x32xf32>
    %40 = vector.broadcast %37 : vector<1x32xf32> to vector<32x32xf32>
    %41 = arith.addf %39, %40 : vector<32x32xf32>
    %cst_20 = arith.constant 0.000000e+00 : f32
    %42 = vector.broadcast %cst_20 : f32 to vector<32x32xf32>
    %43 = arith.maximumf %41, %42 : vector<32x32xf32>
    %44 = vector.extract_strided_slice %43 {offsets = [0, 0], sizes = [16, 32], strides = [1, 1]} : vector<32x32xf32> to vector<16x32xf32>
    %45 = vector.extract_strided_slice %43 {offsets = [16, 0], sizes = [16, 32], strides = [1, 1]} : vector<32x32xf32> to vector<16x32xf32>
    %46 = arith.addf %44, %45 : vector<16x32xf32>
    %cst_21 = arith.constant dense<0.000000e+00> : vector<16xf32>
    %47 = vector.multi_reduction <add>, %46, %cst_21 [1] : vector<16x32xf32> to vector<16xf32>
    %48 = vector.shape_cast %47 : vector<16xf32> to vector<16x1xf32>
    %cst_22 = arith.constant 1.562500e-02 : f32
    %49 = vector.broadcast %cst_22 : f32 to vector<16x1xf32>
    %50 = arith.mulf %48, %49 : vector<16x1xf32>
    %51 = tpu.concatenate %50, %50 in 0 : vector<16x1xf32>, vector<16x1xf32> -> vector<32x1xf32>
    %52 = vector.broadcast %51 : vector<32x1xf32> to vector<32x32xf32>
    %53 = arith.subf %43, %52 : vector<32x32xf32>
    %54 = arith.mulf %53, %53 : vector<32x32xf32>
    %55 = vector.extract_strided_slice %54 {offsets = [0, 0], sizes = [16, 32], strides = [1, 1]} : vector<32x32xf32> to vector<16x32xf32>
    %56 = vector.extract_strided_slice %54 {offsets = [16, 0], sizes = [16, 32], strides = [1, 1]} : vector<32x32xf32> to vector<16x32xf32>
    %57 = arith.addf %55, %56 : vector<16x32xf32>
    %cst_23 = arith.constant dense<0.000000e+00> : vector<16xf32>
    %58 = vector.multi_reduction <add>, %57, %cst_23 [1] : vector<16x32xf32> to vector<16xf32>
    %59 = vector.shape_cast %58 : vector<16xf32> to vector<16x1xf32>
    %cst_24 = arith.constant 1.562500e-02 : f32
    %60 = vector.broadcast %cst_24 : f32 to vector<16x1xf32>
    %61 = arith.mulf %59, %60 : vector<16x1xf32>
    %cst_25 = arith.constant 9.99999974E-6 : f32
    %62 = vector.broadcast %cst_25 : f32 to vector<16x1xf32>
    %63 = arith.addf %61, %62 : vector<16x1xf32>
    %64 = math.rsqrt %63 : vector<16x1xf32>
    %65 = tpu.concatenate %64, %64 in 0 : vector<16x1xf32>, vector<16x1xf32> -> vector<32x1xf32>
    %66 = vector.broadcast %65 : vector<32x1xf32> to vector<32x32xf32>
    %67 = arith.mulf %53, %66 : vector<32x32xf32>
    %c128 = arith.constant 128 : index
    %c0_26 = arith.constant 0 : index
    %68 = vector.load %arg2[%c128, %c0_26] : memref<192x32xf32, #tpu.memory_space<vmem>>, vector<32x4xf32>
    %cst_27 = arith.constant dense<0.000000e+00> : vector<32x4xf32>
    %69 = tpu.matmul %67, %68, %cst_27 {dimension_numbers = #tpu.dot_dimension_numbers<[1], [0], [0], [1], [0, 0, 1, 1], [], []>} : vector<32x32xf32>, vector<32x4xf32>, vector<32x4xf32> -> vector<32x4xf32>
    %70 = arith.addf %35, %69 : vector<32x4xf32>
    %c64 = arith.constant 64 : index
    %c0_28 = arith.constant 0 : index
    %71 = vector.load %arg2[%c64, %c0_28] : memref<192x32xf32, #tpu.memory_space<vmem>>, vector<32x16xf32>
    %c2 = arith.constant 2 : index
    %c0_29 = arith.constant 0 : index
    %72 = vector.load %arg3[%c2, %c0_29] : memref<4x32xf32, #tpu.memory_space<vmem>>, vector<1x16xf32>
    %cst_30 = arith.constant dense<0.000000e+00> : vector<32x16xf32>
    %73 = tpu.matmul %67, %71, %cst_30 {dimension_numbers = #tpu.dot_dimension_numbers<[1], [0], [0], [1], [0, 0, 1, 1], [], []>} : vector<32x32xf32>, vector<32x16xf32>, vector<32x16xf32> -> vector<32x16xf32>
    %cst_31 = arith.constant dense<0.000000e+00> : vector<32x16xf32>
    %74 = tpu.matmul %0, %73, %cst_31 {dimension_numbers = #tpu.dot_dimension_numbers<[1], [0], [0], [1], [0, 0, 1, 1], [], []>} : vector<32x32xf32>, vector<32x16xf32>, vector<32x16xf32> -> vector<32x16xf32>
    %75 = vector.broadcast %72 : vector<1x16xf32> to vector<32x16xf32>
    %76 = arith.addf %74, %75 : vector<32x16xf32>
    %c160 = arith.constant 160 : index
    %c0_32 = arith.constant 0 : index
    %77 = vector.load %arg2[%c160, %c0_32] : memref<192x32xf32, #tpu.memory_space<vmem>>, vector<16x4xf32>
    %cst_33 = arith.constant dense<0.000000e+00> : vector<32x4xf32>
    %78 = tpu.matmul %76, %77, %cst_33 {dimension_numbers = #tpu.dot_dimension_numbers<[1], [0], [0], [1], [0, 0, 1, 1], [], []>} : vector<32x16xf32>, vector<16x4xf32>, vector<32x4xf32> -> vector<32x4xf32>
    %79 = arith.addf %70, %78 : vector<32x4xf32>
    %c3 = arith.constant 3 : index
    %c0_34 = arith.constant 0 : index
    %80 = vector.load %arg3[%c3, %c0_34] : memref<4x32xf32, #tpu.memory_space<vmem>>, vector<1x4xf32>
    %81 = vector.broadcast %80 : vector<1x4xf32> to vector<32x4xf32>
    %82 = arith.addf %79, %81 : vector<32x4xf32>
    %c0_35 = arith.constant 0 : index
    %c0_36 = arith.constant 0 : index
    %83 = vector.load %arg4[%c0_35, %c0_36] : memref<32x4xf32, #tpu.memory_space<vmem>>, vector<32x4xf32>
    tpu.vector_store %arg4[%c0_35, %c0_36], %82 {strides = array<i32>} : memref<32x4xf32, #tpu.memory_space<vmem>>, vector<32x4xf32>,
    return
  }
}

</mosaic_0001>

<llo_original>
// kernel: gconv_module_forward.1
$region0: #{gconv_module_forward.1}
  #allocation0 [shape = 'u32[]', space=smem, size = 0x4, offset = 0x4, fixed_abs, tag = 'smem constant byte address 0x4 - core index']
  #allocation1 [shape = 'u32[144,128]{1,0:T(1,128)}', space=vmem, size = 0x12000, scoped, tag = 'internal scratch']
  %s0 = inlined_call_operand.vmem [shape: f32[32,32], index: 0, kind: input, shape index: {}]
  %s1 = inlined_call_operand.vmem [shape: f32[32,8], index: 1, kind: input, shape index: {}]
  %s2 = inlined_call_operand.vmem [shape: f32[192,32], index: 2, kind: input, shape index: {}]
  %s3 = inlined_call_operand.vmem [shape: f32[4,32], index: 3, kind: input, shape index: {}]
  %s4 = inlined_call_operand.vmem [shape: f32[32,4], index: 4, kind: output, shape index: {}]
  %s5 = sld [smem:[#allocation0]]
  $region26: #{gconv_module_forward.1} parent=0
    _
  %s7 = ssub.s32 1, %s5
  %s8 = scalar_select 0, %s7, %s5
  // Predicated region
  $region2: #{gconv_module_forward.1} parent=0 // pred_check
    _
  $region3: #{gconv_module_forward.1} parent=0 // pred_check_branch
    %10 = sbr.rel (0) target = $region5
  $region4: #{gconv_module_forward.1} parent=0 // pred_region
    _
  $region5: #{gconv_module_forward.1} parent=0 // pred_fallthru
    _
  // Predicated region
  $region6: #{gconv_module_forward.1} parent=0 // pred_check
    _
  $region7: #{gconv_module_forward.1} parent=0 // pred_check_branch
    %12 = sbr.rel (0) target = $region9
  $region8: #{gconv_module_forward.1} parent=0 // pred_region
    _
  $region9: #{gconv_module_forward.1} parent=0 // pred_fallthru
    _
  // Predicated region
  $region10: #{gconv_module_forward.1} parent=0 // pred_check
    _
  $region11: #{gconv_module_forward.1} parent=0 // pred_check_branch
    %14 = sbr.rel (0) target = $region13
  $region12: #{gconv_module_forward.1} parent=0 // pred_region
    _
  $region13: #{gconv_module_forward.1} parent=0 // pred_fallthru
    _
  // Predicated region
  $region14: #{gconv_module_forward.1} parent=0 // pred_check
    _
  $region15: #{gconv_module_forward.1} parent=0 // pred_check_branch
    %16 = sbr.rel (0) target = $region17
  $region16: #{gconv_module_forward.1} parent=0 // pred_region
    _
  $region17: #{gconv_module_forward.1} parent=0 // pred_fallthru
    _
  %v17 = vld [vmem:[%s0] sm:$0xff]
  %v18 = vld [vmem:[%s0 + $0x8] sm:$0xff]
  %v19 = vld [vmem:[%s0 + $0x10] sm:$0xff]
  %v20 = vld [vmem:[%s0 + $0x18] sm:$0xff]
  %v21 = vld [vmem:[%s1] sm:$0xff]
  %v22 = vld [vmem:[%s1 + $0x8] sm:$0xff]
  %v23 = vld [vmem:[%s1 + $0x10] sm:$0xff]
  %v24 = vld [vmem:[%s1 + $0x18] sm:$0xff]
  %v25 = vld [vmem:[%s2] sm:$0xff]
  %v26 = vld [vmem:[%s3] sm:$0x1]
  %vm27 = vcmask 261120
  %v29 = vsel %vm27, %v17, 0
  %v32 = vsel %vm27, %v18, 0
  %v35 = vsel %vm27, %v19, 0
  %v38 = vsel %vm27, %v20, 0
  %40 = vmatprep.subr.mxu0 0.0
  %41 = vmatpush1.msra.mxu0 %v21
  %42 = vmatprep.subr.mxu0 0.0
  %43 = vmatpush1.msra.mxu0 %v22
  %44 = vmatprep.subr.mxu0 0.0
  %45 = vmatpush1.msra.mxu0 %v23
  %46 = vmatprep.subr.mxu0 0.0
  %47 = vmatpush1.msra.mxu0 %v24
  %48 = vmatprep.subr.mxu0 0.0
  %49 = vmatpush1.msra.mxu0 0.0
  %50 = vmatprep.subr.mxu0 0.0
  %51 = vmatpush1.msra.mxu0 0.0
  %52 = vmatprep.subr.mxu0 0.0
  %53 = vmatpush1.msra.mxu0 0.0
  %54 = vmatprep.subr.mxu0 0.0
  %55 = vmatpush1.msra.mxu0 0.0
  %56 = vmatprep.subr.mxu0 0.0
  %57 = vmatpush1.msra.mxu0 0.0
  %58 = vmatprep.subr.mxu0 0.0
  %59 = vmatpush1.msra.mxu0 0.0
  %60 = vmatprep.subr.mxu0 0.0
  %61 = vmatpush1.msra.mxu0 0.0
  %62 = vmatprep.subr.mxu0 0.0
  %63 = vmatpush1.msra.mxu0 0.0
  %64 = vmatprep.subr.mxu0 0.0
  %65 = vmatpush1.msra.mxu0 0.0
  %66 = vmatprep.subr.mxu0 0.0
  %67 = vmatpush1.msra.mxu0 0.0
  %68 = vmatprep.subr.mxu0 0.0
  %69 = vmatpush1.msra.mxu0 0.0
  %70 = vmatprep.subr.mxu0 0.0
  %71 = vmatpush1.msra.mxu0 0.0
  %72 = vmatprep.subr.mxu0 0.0
  %73 = vmatpush1.msra.mxu0 0.0
  %74 = vmatprep.subr.mxu0 0.0
  %75 = vmatpush1.msra.mxu0 0.0
  %76 = vmatprep.subr.mxu0 0.0
  %77 = vmatpush1.msra.mxu0 0.0
  %78 = vmatprep.subr.mxu0 0.0
  %79 = vmatpush1.msra.mxu0 0.0
  %80 = vmatprep.subr.mxu0 0.0
  %81 = vmatpush1.msra.mxu0 0.0
  %82 = vmatprep.subr.mxu0 0.0
  %83 = vmatpush1.msra.mxu0 0.0
  %84 = vmatprep.subr.mxu0 0.0
  %85 = vmatpush1.msra.mxu0 0.0
  %86 = vmatprep.subr.mxu0 0.0
  %87 = vmatpush1.msra.mxu0 0.0
  %88 = vmatprep.subr.mxu0 0.0
  %89 = vmatpush1.msra.mxu0 0.0
  %90 = vmatprep.subr.mxu0 0.0
  %91 = vmatpush1.msra.mxu0 0.0
  %92 = vmatprep.subr.mxu0 0.0
  %93 = vmatpush1.msra.mxu0 0.0
  %94 = vmatprep.subr.mxu0 0.0
  %95 = vmatpush1.msra.mxu0 0.0
  %96 = vmatprep.subr.mxu0 0.0
  %97 = vmatpush1.msra.mxu0 0.0
  %98 = vmatprep.subr.mxu0 0.0
  %99 = vmatpush1.msra.mxu0 0.0
  %100 = vmatprep.subr.mxu0 0.0
  %101 = vmatpush1.msra.mxu0 0.0
  %102 = vmatprep.subr.mxu0 0.0
  %103 = vmatpush1.msra.mxu0 0.0
  %104 = vmatprep.mubr.f32.mxu0 0.0
  %105 = vmatmul.mubr.f32.gmra.mrb[0].mxu0 %v29
  %v106 = vpop.f32.mrb[0].mxu0
  %v107 = vadd.f32 0.0, %v106
  %v108 = vpop.f32.mrb[0].mxu0
  %109 = vmatprep.mubr.f32.mxu0 0.0
  %110 = vmatmul.mubr.f32.gmra.mrb[0].mxu0 %v32
  %v111 = vpop.f32.mrb[0].mxu0
  %v112 = vadd.f32 0.0, %v111
  %v113 = vpop.f32.mrb[0].mxu0
  %114 = vmatprep.mubr.f32.mxu0 0.0
  %115 = vmatmul.mubr.f32.gmra.mrb[0].mxu0 %v35
  %v116 = vpop.f32.mrb[0].mxu0
  %v117 = vadd.f32 0.0, %v116
  %v118 = vpop.f32.mrb[0].mxu0
  %119 = vmatprep.mubr.f32.mxu0 0.0
  %120 = vmatmul.mubr.f32.gmra.mrb[0].mxu0 %v38
  %v121 = vpop.f32.mrb[0].mxu0
  %v122 = vadd.f32 0.0, %v121
  %v123 = vpop.f32.mrb[0].mxu0
  %124 = vdwg.mxu0
  %v125 = vlaneseq
  %v126 = vshrl.u32 %v125, 7
  %v127 = vsub.s32 0, %v126
  %v128 = vrot.slane %v26, %v127
  %vm129 = vcmask 64512
  %v131 = vsel %vm129, %v107, 0
  %v134 = vsel %vm129, %v112, 0
  %v137 = vsel %vm129, %v117, 0
  %v140 = vsel %vm129, %v122, 0
  %142 = vmatprep.subr.mxu0 0.0
  %143 = vmatpush1.msra.mxu0 %v25
  %144 = vmatprep.subr.mxu0 0.0
  %145 = vmatpush1.msra.mxu0 0.0
  %146 = vmatprep.subr.mxu0 0.0
  %147 = vmatpush1.msra.mxu0 0.0
  %148 = vmatprep.subr.mxu0 0.0
  %149 = vmatpush1.msra.mxu0 0.0
  %150 = vmatprep.subr.mxu0 0.0
  %151 = vmatpush1.msra.mxu0 0.0
  %152 = vmatprep.subr.mxu0 0.0
  %153 = vmatpush1.msra.mxu0 0.0
  %154 = vmatprep.subr.mxu0 0.0
  %155 = vmatpush1.msra.mxu0 0.0
  %156 = vmatprep.subr.mxu0 0.0
  %157 = vmatpush1.msra.mxu0 0.0
  %158 = vmatprep.subr.mxu0 0.0
  %159 = vmatpush1.msra.mxu0 0.0
  %160 = vmatprep.subr.mxu0 0.0
  %161 = vmatpush1.msra.mxu0 0.0
  %162 = vmatprep.subr.mxu0 0.0
  %163 = vmatpush1.msra.mxu0 0.0
  %164 = vmatprep.subr.mxu0 0.0
  %165 = vmatpush1.msra.mxu0 0.0
  %166 = vmatprep.subr.mxu0 0.0
  %167 = vmatpush1.msra.mxu0 0.0
  %168 = vmatprep.subr.mxu0 0.0
  %169 = vmatpush1.msra.mxu0 0.0
  %170 = vmatprep.subr.mxu0 0.0
  %171 = vmatpush1.msra.mxu0 0.0
  %172 = vmatprep.subr.mxu0 0.0
  %173 = vmatpush1.msra.mxu0 0.0
  %174 = vmatprep.subr.mxu0 0.0
  %175 = vmatpush1.msra.mxu0 0.0
  %176 = vmatprep.subr.mxu0 0.0
  %177 = vmatpush1.msra.mxu0 0.0
  %178 = vmatprep.subr.mxu0 0.0
  %179 = vmatpush1.msra.mxu0 0.0
  %180 = vmatprep.subr.mxu0 0.0
  %181 = vmatpush1.msra.mxu0 0.0
  %182 = vmatprep.subr.mxu0 0.0
  %183 = vmatpush1.msra.mxu0 0.0
  %184 = vmatprep.subr.mxu0 0.0
  %185 = vmatpush1.msra.mxu0 0.0
  %186 = vmatprep.subr.mxu0 0.0
  %187 = vmatpush1.msra.mxu0 0.0
  %188 = vmatprep.subr.mxu0 0.0
  %189 = vmatpush1.msra.mxu0 0.0
  %190 = vmatprep.subr.mxu0 0.0
  %191 = vmatpush1.msra.mxu0 0.0
  %192 = vmatprep.subr.mxu0 0.0
  %193 = vmatpush1.msra.mxu0 0.0
  %194 = vmatprep.subr.mxu0 0.0
  %195 = vmatpush1.msra.mxu0 0.0
  %196 = vmatprep.subr.mxu0 0.0
  %197 = vmatpush1.msra.mxu0 0.0
  %198 = vmatprep.subr.mxu0 0.0
  %199 = vmatpush1.msra.mxu0 0.0
  %200 = vmatprep.subr.mxu0 0.0
  %201 = vmatpush1.msra.mxu0 0.0
  %202 = vmatprep.subr.mxu0 0.0
  %203 = vmatpush1.msra.mxu0 0.0
  %204 = vmatprep.subr.mxu0 0.0
  %205 = vmatpush1.msra.mxu0 0.0
  %206 = vmatprep.mubr.f32.mxu0 0.0
  %207 = vmatmul.mubr.f32.gmra.mrb[0].mxu0 %v131
  %v208 = vpop.f32.mrb[0].mxu0
  %v209 = vadd.f32 %v128, %v208
  %v210 = vpop.f32.mrb[0].mxu0
  %211 = vmatprep.mubr.f32.mxu0 0.0
  %212 = vmatmul.mubr.f32.gmra.mrb[0].mxu0 %v134
  %v213 = vpop.f32.mrb[0].mxu0
  %v214 = vadd.f32 %v128, %v213
  %v215 = vpop.f32.mrb[0].mxu0
  %216 = vmatprep.mubr.f32.mxu0 0.0
  %217 = vmatmul.mubr.f32.gmra.mrb[0].mxu0 %v137
  %v218 = vpop.f32.mrb[0].mxu0
  %v219 = vadd.f32 %v128, %v218
  %v220 = vpop.f32.mrb[0].mxu0
  %221 = vmatprep.mubr.f32.mxu0 0.0
  %222 = vmatmul.mubr.f32.gmra.mrb[0].mxu0 %v140
  %v223 = vpop.f32.mrb[0].mxu0
  %v224 = vadd.f32 %v128, %v223
  %v225 = vpop.f32.mrb[0].mxu0
  %226 = vdwg.mxu0
  %v227 = vmax.f32 %v209, 0.0
  %v228 = vmax.f32 %v214, 0.0
  %v229 = vmax.f32 %v219, 0.0
  %v230 = vmax.f32 %v224, 0.0
  %v231 = vadd.f32 %v227, %v229
  %v232 = vadd.f32 %v228, %v230
  %v233 = vsel %vm27, %v231, 0.0
  %234 = vadd.xlane.f32.xlu0 %v233
  %v235 = vpop.xlane.xlu0 %234
  %v236 = vsel %vm27, %v232, 0.0
  %237 = vadd.xlane.f32.xlu0 %v236
  %v238 = vpop.xlane.xlu0 %237
  %v239 = vmul.f32 %v235, 0.015625
  %v240 = vmul.f32 %v238, 0.015625
  %242 = vset.pattern.permute.xlu0 0
  %243 = vperm.xlu0 %242, %v239
  %v244 = vpop.permute.xlu0 %243
  %247 = vset.pattern.permute.xlu0 0
  %248 = vperm.xlu0 %247, %v240
  %v249 = vpop.permute.xlu0 %248
  %v251 = vsub.f32 %v227, %v244
  %v252 = vsub.f32 %v228, %v249
  %v253 = vsub.f32 %v229, %v244
  %v254 = vsub.f32 %v230, %v249
  %v255 = vmul.f32 %v251, %v251
  %v256 = vmul.f32 %v252, %v252
  %v257 = vmul.f32 %v253, %v253
  %v258 = vmul.f32 %v254, %v254
  %v259 = vadd.f32 %v255, %v257
  %v260 = vadd.f32 %v256, %v258
  %v261 = vsel %vm27, %v259, 0.0
  %262 = vadd.xlane.f32.xlu0 %v261
  %v263 = vpop.xlane.xlu0 %262
  %v264 = vsel %vm27, %v260, 0.0
  %265 = vadd.xlane.f32.xlu0 %v264
  %v266 = vpop.xlane.xlu0 %265
  %v267 = vmul.f32 %v263, 0.015625
  %v268 = vmul.f32 %v266, 0.015625
  %v269 = vadd.f32 %v267, 1e-05
  %v270 = vadd.f32 %v268, 1e-05
  %v271 = vrsqrt.pop %v269
  %v272 = vrsqrt.pop %v270
  %274 = vset.pattern.permute.xlu0 0
  %275 = vperm.xlu0 %274, %v271
  %v276 = vpop.permute.xlu0 %275
  %279 = vset.pattern.permute.xlu0 0
  %280 = vperm.xlu0 %279, %v272
  %v281 = vpop.permute.xlu0 %280
  %v283 = vmul.f32 %v251, %v276
  %v284 = vmul.f32 %v252, %v281
  %v285 = vmul.f32 %v253, %v276
  %v286 = vmul.f32 %v254, %v281
  %v287 = vld [vmem:[%s2 + $0x60] sm:$0xff]
  %v288 = vld [vmem:[%s2 + $0x68] sm:$0xff]
  %v289 = vld [vmem:[%s2 + $0x70] sm:$0xff]
  %v290 = vld [vmem:[%s2 + $0x78] sm:$0xff]
  %v291 = vld [vmem:[%s2 + $0x20] sm:$0xff]
  %v292 = vld [vmem:[%s2 + $0x28] sm:$0xff]
  %v293 = vld [vmem:[%s2 + $0x30] sm:$0xff]
  %v294 = vld [vmem:[%s2 + $0x38] sm:$0xff]
  %v295 = vld [vmem:[%s3 + $0x1] sm:$0x1]
  %v297 = vsel %vm27, %v283, 0
  %v300 = vsel %vm27, %v284, 0
  %v303 = vsel %vm27, %v285, 0
  %v306 = vsel %vm27, %v286, 0
  %308 = vmatprep.subr.mxu0 0.0
  %309 = vmatpush1.msra.mxu0 %v291
  %310 = vmatprep.subr.mxu0 0.0
  %311 = vmatpush1.msra.mxu0 %v292
  %312 = vmatprep.subr.mxu0 0.0
  %313 = vmatpush1.msra.mxu0 %v293
  %314 = vmatprep.subr.mxu0 0.0
  %315 = vmatpush1.msra.mxu0 %v294
  %316 = vmatprep.subr.mxu0 0.0
  %317 = vmatpush1.msra.mxu0 0.0
  %318 = vmatprep.subr.mxu0 0.0
  %319 = vmatpush1.msra.mxu0 0.0
  %320 = vmatprep.subr.mxu0 0.0
  %321 = vmatpush1.msra.mxu0 0.0
  %322 = vmatprep.subr.mxu0 0.0
  %323 = vmatpush1.msra.mxu0 0.0
  %324 = vmatprep.subr.mxu0 0.0
  %325 = vmatpush1.msra.mxu0 0.0
  %326 = vmatprep.subr.mxu0 0.0
  %327 = vmatpush1.msra.mxu0 0.0
  %328 = vmatprep.subr.mxu0 0.0
  %329 = vmatpush1.msra.mxu0 0.0
  %330 = vmatprep.subr.mxu0 0.0
  %331 = vmatpush1.msra.mxu0 0.0
  %332 = vmatprep.subr.mxu0 0.0
  %333 = vmatpush1.msra.mxu0 0.0
  %334 = vmatprep.subr.mxu0 0.0
  %335 = vmatpush1.msra.mxu0 0.0
  %336 = vmatprep.subr.mxu0 0.0
  %337 = vmatpush1.msra.mxu0 0.0
  %338 = vmatprep.subr.mxu0 0.0
  %339 = vmatpush1.msra.mxu0 0.0
  %340 = vmatprep.subr.mxu0 0.0
  %341 = vmatpush1.msra.mxu0 0.0
  %342 = vmatprep.subr.mxu0 0.0
  %343 = vmatpush1.msra.mxu0 0.0
  %344 = vmatprep.subr.mxu0 0.0
  %345 = vmatpush1.msra.mxu0 0.0
  %346 = vmatprep.subr.mxu0 0.0
  %347 = vmatpush1.msra.mxu0 0.0
  %348 = vmatprep.subr.mxu0 0.0
  %349 = vmatpush1.msra.mxu0 0.0
  %350 = vmatprep.subr.mxu0 0.0
  %351 = vmatpush1.msra.mxu0 0.0
  %352 = vmatprep.subr.mxu0 0.0
  %353 = vmatpush1.msra.mxu0 0.0
  %354 = vmatprep.subr.mxu0 0.0
  %355 = vmatpush1.msra.mxu0 0.0
  %356 = vmatprep.subr.mxu0 0.0
  %357 = vmatpush1.msra.mxu0 0.0
  %358 = vmatprep.subr.mxu0 0.0
  %359 = vmatpush1.msra.mxu0 0.0
  %360 = vmatprep.subr.mxu0 0.0
  %361 = vmatpush1.msra.mxu0 0.0
  %362 = vmatprep.subr.mxu0 0.0
  %363 = vmatpush1.msra.mxu0 0.0
  %364 = vmatprep.subr.mxu0 0.0
  %365 = vmatpush1.msra.mxu0 0.0
  %366 = vmatprep.subr.mxu0 0.0
  %367 = vmatpush1.msra.mxu0 0.0
  %368 = vmatprep.subr.mxu0 0.0
  %369 = vmatpush1.msra.mxu0 0.0
  %370 = vmatprep.subr.mxu0 0.0
  %371 = vmatpush1.msra.mxu0 0.0
  %372 = vmatprep.mubr.f32.mxu0 0.0
  %373 = vmatmul.mubr.f32.gmra.mrb[0].mxu0 %v297
  %v374 = vpop.f32.mrb[0].mxu0
  %v375 = vadd.f32 0.0, %v374
  %v376 = vpop.f32.mrb[0].mxu0
  %377 = vmatprep.mubr.f32.mxu0 0.0
  %378 = vmatmul.mubr.f32.gmra.mrb[0].mxu0 %v300
  %v379 = vpop.f32.mrb[0].mxu0
  %v380 = vadd.f32 0.0, %v379
  %v381 = vpop.f32.mrb[0].mxu0
  %382 = vmatprep.mubr.f32.mxu0 0.0
  %383 = vmatmul.mubr.f32.gmra.mrb[0].mxu0 %v303
  %v384 = vpop.f32.mrb[0].mxu0
  %v385 = vadd.f32 0.0, %v384
  %v386 = vpop.f32.mrb[0].mxu0
  %387 = vmatprep.mubr.f32.mxu0 0.0
  %388 = vmatmul.mubr.f32.gmra.mrb[0].mxu0 %v306
  %v389 = vpop.f32.mrb[0].mxu0
  %v390 = vadd.f32 0.0, %v389
  %v391 = vpop.f32.mrb[0].mxu0
  %392 = vdwg.mxu0
  %v393 = vlaneseq
  %v394 = vshrl.u32 %v393, 7
  %v395 = vsub.s32 0, %v394
  %v396 = vrot.slane %v295, %v395
  %397 = vmatprep.subr.mxu0 0.0
  %398 = vmatpush1.msra.mxu0 %v375
  %399 = vmatprep.subr.mxu0 0.0
  %400 = vmatpush1.msra.mxu0 %v380
  %401 = vmatprep.subr.mxu0 0.0
  %402 = vmatpush1.msra.mxu0 %v385
  %403 = vmatprep.subr.mxu0 0.0
  %404 = vmatpush1.msra.mxu0 %v390
  %405 = vmatprep.subr.mxu0 0.0
  %406 = vmatpush1.msra.mxu0 0.0
  %407 = vmatprep.subr.mxu0 0.0
  %408 = vmatpush1.msra.mxu0 0.0
  %409 = vmatprep.subr.mxu0 0.0
  %410 = vmatpush1.msra.mxu0 0.0
  %411 = vmatprep.subr.mxu0 0.0
  %412 = vmatpush1.msra.mxu0 0.0
  %413 = vmatprep.subr.mxu0 0.0
  %414 = vmatpush1.msra.mxu0 0.0
  %415 = vmatprep.subr.mxu0 0.0
  %416 = vmatpush1.msra.mxu0 0.0
  %417 = vmatprep.subr.mxu0 0.0
  %418 = vmatpush1.msra.mxu0 0.0
  %419 = vmatprep.subr.mxu0 0.0
  %420 = vmatpush1.msra.mxu0 0.0
  %421 = vmatprep.subr.mxu0 0.0
  %422 = vmatpush1.msra.mxu0 0.0
  %423 = vmatprep.subr.mxu0 0.0
  %424 = vmatpush1.msra.mxu0 0.0
  %425 = vmatprep.subr.mxu0 0.0
  %426 = vmatpush1.msra.mxu0 0.0
  %427 = vmatprep.subr.mxu0 0.0
  %428 = vmatpush1.msra.mxu0 0.0
  %429 = vmatprep.subr.mxu0 0.0
  %430 = vmatpush1.msra.mxu0 0.0
  %431 = vmatprep.subr.mxu0 0.0
  %432 = vmatpush1.msra.mxu0 0.0
  %433 = vmatprep.subr.mxu0 0.0
  %434 = vmatpush1.msra.mxu0 0.0
  %435 = vmatprep.subr.mxu0 0.0
  %436 = vmatpush1.msra.mxu0 0.0
  %437 = vmatprep.subr.mxu0 0.0
  %438 = vmatpush1.msra.mxu0 0.0
  %439 = vmatprep.subr.mxu0 0.0
  %440 = vmatpush1.msra.mxu0 0.0
  %441 = vmatprep.subr.mxu0 0.0
  %442 = vmatpush1.msra.mxu0 0.0
  %443 = vmatprep.subr.mxu0 0.0
  %444 = vmatpush1.msra.mxu0 0.0
  %445 = vmatprep.subr.mxu0 0.0
  %446 = vmatpush1.msra.mxu0 0.0
  %447 = vmatprep.subr.mxu0 0.0
  %448 = vmatpush1.msra.mxu0 0.0
  %449 = vmatprep.subr.mxu0 0.0
  %450 = vmatpush1.msra.mxu0 0.0
  %451 = vmatprep.subr.mxu0 0.0
  %452 = vmatpush1.msra.mxu0 0.0
  %453 = vmatprep.subr.mxu0 0.0
  %454 = vmatpush1.msra.mxu0 0.0
  %455 = vmatprep.subr.mxu0 0.0
  %456 = vmatpush1.msra.mxu0 0.0
  %457 = vmatprep.subr.mxu0 0.0
  %458 = vmatpush1.msra.mxu0 0.0
  %459 = vmatprep.subr.mxu0 0.0
  %460 = vmatpush1.msra.mxu0 0.0
  %461 = vmatprep.mubr.f32.mxu0 0.0
  %462 = vmatmul.mubr.f32.gmra.mrb[0].mxu0 %v29
  %v463 = vpop.f32.mrb[0].mxu0
  %v464 = vadd.f32 %v396, %v463
  %v465 = vpop.f32.mrb[0].mxu0
  %466 = vmatprep.mubr.f32.mxu0 0.0
  %467 = vmatmul.mubr.f32.gmra.mrb[0].mxu0 %v32
  %v468 = vpop.f32.mrb[0].mxu0
  %v469 = vadd.f32 %v396, %v468
  %v470 = vpop.f32.mrb[0].mxu0
  %471 = vmatprep.mubr.f32.mxu0 0.0
  %472 = vmatmul.mubr.f32.gmra.mrb[0].mxu0 %v35
  %v473 = vpop.f32.mrb[0].mxu0
  %v474 = vadd.f32 %v396, %v473
  %v475 = vpop.f32.mrb[0].mxu0
  %476 = vmatprep.mubr.f32.mxu0 0.0
  %477 = vmatmul.mubr.f32.gmra.mrb[0].mxu0 %v38
  %v478 = vpop.f32.mrb[0].mxu0
  %v479 = vadd.f32 %v396, %v478
  %v480 = vpop.f32.mrb[0].mxu0
  %481 = vdwg.mxu0
  %v482 = vmax.f32 %v464, 0.0
  %v483 = vmax.f32 %v469, 0.0
  %v484 = vmax.f32 %v474, 0.0
  %v485 = vmax.f32 %v479, 0.0
  %v486 = vadd.f32 %v482, %v484
  %v487 = vadd.f32 %v483, %v485
  %v488 = vsel %vm27, %v486, 0.0
  %489 = vadd.xlane.f32.xlu0 %v488
  %v490 = vpop.xlane.xlu0 %489
  %v491 = vsel %vm27, %v487, 0.0
  %492 = vadd.xlane.f32.xlu0 %v491
  %v493 = vpop.xlane.xlu0 %492
  %v494 = vmul.f32 %v490, 0.015625
  %v495 = vmul.f32 %v493, 0.015625
  %497 = vset.pattern.permute.xlu0 0
  %498 = vperm.xlu0 %497, %v494
  %v499 = vpop.permute.xlu0 %498
  %502 = vset.pattern.permute.xlu0 0
  %503 = vperm.xlu0 %502, %v495
  %v504 = vpop.permute.xlu0 %503
  %v506 = vsub.f32 %v482, %v499
  %v507 = vsub.f32 %v483, %v504
  %v508 = vsub.f32 %v484, %v499
  %v509 = vsub.f32 %v485, %v504
  %v510 = vmul.f32 %v506, %v506
  %v511 = vmul.f32 %v507, %v507
  %v512 = vmul.f32 %v508, %v508
  %v513 = vmul.f32 %v509, %v509
  %v514 = vadd.f32 %v510, %v512
  %v515 = vadd.f32 %v511, %v513
  %v516 = vsel %vm27, %v514, 0.0
  %517 = vadd.xlane.f32.xlu0 %v516
  %v518 = vpop.xlane.xlu0 %517
  %v519 = vsel %vm27, %v515, 0.0
  %520 = vadd.xlane.f32.xlu0 %v519
  %v521 = vpop.xlane.xlu0 %520
  %v522 = vmul.f32 %v518, 0.015625
  %v523 = vmul.f32 %v521, 0.015625
  %v524 = vadd.f32 %v522, 1e-05
  %v525 = vadd.f32 %v523, 1e-05
  %v526 = vrsqrt.pop %v524
  %v527 = vrsqrt.pop %v525
  %529 = vset.pattern.permute.xlu0 0
  %530 = vperm.xlu0 %529, %v526
  %v531 = vpop.permute.xlu0 %530
  %534 = vset.pattern.permute.xlu0 0
  %535 = vperm.xlu0 %534, %v527
  %v536 = vpop.permute.xlu0 %535
  %v538 = vmul.f32 %v506, %v531
  %v539 = vmul.f32 %v507, %v536
  %v540 = vmul.f32 %v508, %v531
  %v541 = vmul.f32 %v509, %v536
  %v542 = vld [vmem:[%s2 + $0x80] sm:$0xff]
  %v543 = vld [vmem:[%s2 + $0x88] sm:$0xff]
  %v544 = vld [vmem:[%s2 + $0x90] sm:$0xff]
  %v545 = vld [vmem:[%s2 + $0x98] sm:$0xff]
  %v547 = vsel %vm27, %v538, 0
  %v550 = vsel %vm27, %v539, 0
  %v553 = vsel %vm27, %v540, 0
  %v556 = vsel %vm27, %v541, 0
  %558 = vmatprep.subr.mxu0 0.0
  %559 = vmatpush1.msra.mxu0 %v542
  %560 = vmatprep.subr.mxu0 0.0
  %561 = vmatpush1.msra.mxu0 %v543
  %562 = vmatprep.subr.mxu0 0.0
  %563 = vmatpush1.msra.mxu0 %v544
  %564 = vmatprep.subr.mxu0 0.0
  %565 = vmatpush1.msra.mxu0 %v545
  %566 = vmatprep.subr.mxu0 0.0
  %567 = vmatpush1.msra.mxu0 0.0
  %568 = vmatprep.subr.mxu0 0.0
  %569 = vmatpush1.msra.mxu0 0.0
  %570 = vmatprep.subr.mxu0 0.0
  %571 = vmatpush1.msra.mxu0 0.0
  %572 = vmatprep.subr.mxu0 0.0
  %573 = vmatpush1.msra.mxu0 0.0
  %574 = vmatprep.subr.mxu0 0.0
  %575 = vmatpush1.msra.mxu0 0.0
  %576 = vmatprep.subr.mxu0 0.0
  %577 = vmatpush1.msra.mxu0 0.0
  %578 = vmatprep.subr.mxu0 0.0
  %579 = vmatpush1.msra.mxu0 0.0
  %580 = vmatprep.subr.mxu0 0.0
  %581 = vmatpush1.msra.mxu0 0.0
  %582 = vmatprep.subr.mxu0 0.0
  %583 = vmatpush1.msra.mxu0 0.0
  %584 = vmatprep.subr.mxu0 0.0
  %585 = vmatpush1.msra.mxu0 0.0
  %586 = vmatprep.subr.mxu0 0.0
  %587 = vmatpush1.msra.mxu0 0.0
  %588 = vmatprep.subr.mxu0 0.0
  %589 = vmatpush1.msra.mxu0 0.0
  %590 = vmatprep.subr.mxu0 0.0
  %591 = vmatpush1.msra.mxu0 0.0
  %592 = vmatprep.subr.mxu0 0.0
  %593 = vmatpush1.msra.mxu0 0.0
  %594 = vmatprep.subr.mxu0 0.0
  %595 = vmatpush1.msra.mxu0 0.0
  %596 = vmatprep.subr.mxu0 0.0
  %597 = vmatpush1.msra.mxu0 0.0
  %598 = vmatprep.subr.mxu0 0.0
  %599 = vmatpush1.msra.mxu0 0.0
  %600 = vmatprep.subr.mxu0 0.0
  %601 = vmatpush1.msra.mxu0 0.0
  %602 = vmatprep.subr.mxu0 0.0
  %603 = vmatpush1.msra.mxu0 0.0
  %604 = vmatprep.subr.mxu0 0.0
  %605 = vmatpush1.msra.mxu0 0.0
  %606 = vmatprep.subr.mxu0 0.0
  %607 = vmatpush1.msra.mxu0 0.0
  %608 = vmatprep.subr.mxu0 0.0
  %609 = vmatpush1.msra.mxu0 0.0
  %610 = vmatprep.subr.mxu0 0.0
  %611 = vmatpush1.msra.mxu0 0.0
  %612 = vmatprep.subr.mxu0 0.0
  %613 = vmatpush1.msra.mxu0 0.0
  %614 = vmatprep.subr.mxu0 0.0
  %615 = vmatpush1.msra.mxu0 0.0
  %616 = vmatprep.subr.mxu0 0.0
  %617 = vmatpush1.msra.mxu0 0.0
  %618 = vmatprep.subr.mxu0 0.0
  %619 = vmatpush1.msra.mxu0 0.0
  %620 = vmatprep.subr.mxu0 0.0
  %621 = vmatpush1.msra.mxu0 0.0
  %622 = vmatprep.mubr.f32.mxu0 0.0
  %623 = vmatmul.mubr.f32.gmra.mrb[0].mxu0 %v547
  %v624 = vpop.f32.mrb[0].mxu0
  %v625 = vadd.f32 0.0, %v624
  %v626 = vpop.f32.mrb[0].mxu0
  %627 = vmatprep.mubr.f32.mxu0 0.0
  %628 = vmatmul.mubr.f32.gmra.mrb[0].mxu0 %v550
  %v629 = vpop.f32.mrb[0].mxu0
  %v630 = vadd.f32 0.0, %v629
  %v631 = vpop.f32.mrb[0].mxu0
  %632 = vmatprep.mubr.f32.mxu0 0.0
  %633 = vmatmul.mubr.f32.gmra.mrb[0].mxu0 %v553
  %v634 = vpop.f32.mrb[0].mxu0
  %v635 = vadd.f32 0.0, %v634
  %v636 = vpop.f32.mrb[0].mxu0
  %637 = vmatprep.mubr.f32.mxu0 0.0
  %638 = vmatmul.mubr.f32.gmra.mrb[0].mxu0 %v556
  %v639 = vpop.f32.mrb[0].mxu0
  %v640 = vadd.f32 0.0, %v639
  %v641 = vpop.f32.mrb[0].mxu0
  %642 = vdwg.mxu0
  %643 = vmatprep.subr.mxu0 0.0
  %644 = vmatpush1.msra.mxu0 %v287
  %645 = vmatprep.subr.mxu0 0.0
  %646 = vmatpush1.msra.mxu0 %v288
  %647 = vmatprep.subr.mxu0 0.0
  %648 = vmatpush1.msra.mxu0 %v289
  %649 = vmatprep.subr.mxu0 0.0
  %650 = vmatpush1.msra.mxu0 %v290
  %651 = vmatprep.subr.mxu0 0.0
  %652 = vmatpush1.msra.mxu0 0.0
  %653 = vmatprep.subr.mxu0 0.0
  %654 = vmatpush1.msra.mxu0 0.0
  %655 = vmatprep.subr.mxu0 0.0
  %656 = vmatpush1.msra.mxu0 0.0
  %657 = vmatprep.subr.mxu0 0.0
  %658 = vmatpush1.msra.mxu0 0.0
  %659 = vmatprep.subr.mxu0 0.0
  %660 = vmatpush1.msra.mxu0 0.0
  %661 = vmatprep.subr.mxu0 0.0
  %662 = vmatpush1.msra.mxu0 0.0
  %663 = vmatprep.subr.mxu0 0.0
  %664 = vmatpush1.msra.mxu0 0.0
  %665 = vmatprep.subr.mxu0 0.0
  %666 = vmatpush1.msra.mxu0 0.0
  %667 = vmatprep.subr.mxu0 0.0
  %668 = vmatpush1.msra.mxu0 0.0
  %669 = vmatprep.subr.mxu0 0.0
  %670 = vmatpush1.msra.mxu0 0.0
  %671 = vmatprep.subr.mxu0 0.0
  %672 = vmatpush1.msra.mxu0 0.0
  %673 = vmatprep.subr.mxu0 0.0
  %674 = vmatpush1.msra.mxu0 0.0
  %675 = vmatprep.subr.mxu0 0.0
  %676 = vmatpush1.msra.mxu0 0.0
  %677 = vmatprep.subr.mxu0 0.0
  %678 = vmatpush1.msra.mxu0 0.0
  %679 = vmatprep.subr.mxu0 0.0
  %680 = vmatpush1.msra.mxu0 0.0
  %681 = vmatprep.subr.mxu0 0.0
  %682 = vmatpush1.msra.mxu0 0.0
  %683 = vmatprep.subr.mxu0 0.0
  %684 = vmatpush1.msra.mxu0 0.0
  %685 = vmatprep.subr.mxu0 0.0
  %686 = vmatpush1.msra.mxu0 0.0
  %687 = vmatprep.subr.mxu0 0.0
  %688 = vmatpush1.msra.mxu0 0.0
  %689 = vmatprep.subr.mxu0 0.0
  %690 = vmatpush1.msra.mxu0 0.0
  %691 = vmatprep.subr.mxu0 0.0
  %692 = vmatpush1.msra.mxu0 0.0
  %693 = vmatprep.subr.mxu0 0.0
  %694 = vmatpush1.msra.mxu0 0.0
  %695 = vmatprep.subr.mxu0 0.0
  %696 = vmatpush1.msra.mxu0 0.0
  %697 = vmatprep.subr.mxu0 0.0
  %698 = vmatpush1.msra.mxu0 0.0
  %699 = vmatprep.subr.mxu0 0.0
  %700 = vmatpush1.msra.mxu0 0.0
  %701 = vmatprep.subr.mxu0 0.0
  %702 = vmatpush1.msra.mxu0 0.0
  %703 = vmatprep.subr.mxu0 0.0
  %704 = vmatpush1.msra.mxu0 0.0
  %705 = vmatprep.subr.mxu0 0.0
  %706 = vmatpush1.msra.mxu0 0.0
  %707 = vmatprep.mubr.f32.mxu0 0.0
  %708 = vmatmul.mubr.f32.gmra.mrb[0].mxu0 %v297
  %v709 = vpop.f32.mrb[0].mxu0
  %v710 = vadd.f32 %v625, %v709
  %v711 = vpop.f32.mrb[0].mxu0
  %712 = vmatprep.mubr.f32.mxu0 0.0
  %713 = vmatmul.mubr.f32.gmra.mrb[0].mxu0 %v300
  %v714 = vpop.f32.mrb[0].mxu0
  %v715 = vadd.f32 %v630, %v714
  %v716 = vpop.f32.mrb[0].mxu0
  %717 = vmatprep.mubr.f32.mxu0 0.0
  %718 = vmatmul.mubr.f32.gmra.mrb[0].mxu0 %v303
  %v719 = vpop.f32.mrb[0].mxu0
  %v720 = vadd.f32 %v635, %v719
  %v721 = vpop.f32.mrb[0].mxu0
  %722 = vmatprep.mubr.f32.mxu0 0.0
  %723 = vmatmul.mubr.f32.gmra.mrb[0].mxu0 %v306
  %v724 = vpop.f32.mrb[0].mxu0
  %v725 = vadd.f32 %v640, %v724
  %v726 = vpop.f32.mrb[0].mxu0
  %727 = vdwg.mxu0
  %v728 = vld [vmem:[%s2 + $0x40] sm:$0xff]
  %v729 = vld [vmem:[%s2 + $0x48] sm:$0xff]
  %v730 = vld [vmem:[%s2 + $0x50] sm:$0xff]
  %v731 = vld [vmem:[%s2 + $0x58] sm:$0xff]
  %v732 = vld [vmem:[%s3 + $0x2] sm:$0x1]
  %733 = vmatprep.subr.mxu0 0.0
  %734 = vmatpush1.msra.mxu0 %v728
  %735 = vmatprep.subr.mxu0 0.0
  %736 = vmatpush1.msra.mxu0 %v729
  %737 = vmatprep.subr.mxu0 0.0
  %738 = vmatpush1.msra.mxu0 %v730
  %739 = vmatprep.subr.mxu0 0.0
  %740 = vmatpush1.msra.mxu0 %v731
  %741 = vmatprep.subr.mxu0 0.0
  %742 = vmatpush1.msra.mxu0 0.0
  %743 = vmatprep.subr.mxu0 0.0
  %744 = vmatpush1.msra.mxu0 0.0
  %745 = vmatprep.subr.mxu0 0.0
  %746 = vmatpush1.msra.mxu0 0.0
  %747 = vmatprep.subr.mxu0 0.0
  %748 = vmatpush1.msra.mxu0 0.0
  %749 = vmatprep.subr.mxu0 0.0
  %750 = vmatpush1.msra.mxu0 0.0
  %751 = vmatprep.subr.mxu0 0.0
  %752 = vmatpush1.msra.mxu0 0.0
  %753 = vmatprep.subr.mxu0 0.0
  %754 = vmatpush1.msra.mxu0 0.0
  %755 = vmatprep.subr.mxu0 0.0
  %756 = vmatpush1.msra.mxu0 0.0
  %757 = vmatprep.subr.mxu0 0.0
  %758 = vmatpush1.msra.mxu0 0.0
  %759 = vmatprep.subr.mxu0 0.0
  %760 = vmatpush1.msra.mxu0 0.0
  %761 = vmatprep.subr.mxu0 0.0
  %762 = vmatpush1.msra.mxu0 0.0
  %763 = vmatprep.subr.mxu0 0.0
  %764 = vmatpush1.msra.mxu0 0.0
  %765 = vmatprep.subr.mxu0 0.0
  %766 = vmatpush1.msra.mxu0 0.0
  %767 = vmatprep.subr.mxu0 0.0
  %768 = vmatpush1.msra.mxu0 0.0
  %769 = vmatprep.subr.mxu0 0.0
  %770 = vmatpush1.msra.mxu0 0.0
  %771 = vmatprep.subr.mxu0 0.0
  %772 = vmatpush1.msra.mxu0 0.0
  %773 = vmatprep.subr.mxu0 0.0
  %774 = vmatpush1.msra.mxu0 0.0
  %775 = vmatprep.subr.mxu0 0.0
  %776 = vmatpush1.msra.mxu0 0.0
  %777 = vmatprep.subr.mxu0 0.0
  %778 = vmatpush1.msra.mxu0 0.0
  %779 = vmatprep.subr.mxu0 0.0
  %780 = vmatpush1.msra.mxu0 0.0
  %781 = vmatprep.subr.mxu0 0.0
  %782 = vmatpush1.msra.mxu0 0.0
  %783 = vmatprep.subr.mxu0 0.0
  %784 = vmatpush1.msra.mxu0 0.0
  %785 = vmatprep.subr.mxu0 0.0
  %786 = vmatpush1.msra.mxu0 0.0
  %787 = vmatprep.subr.mxu0 0.0
  %788 = vmatpush1.msra.mxu0 0.0
  %789 = vmatprep.subr.mxu0 0.0
  %790 = vmatpush1.msra.mxu0 0.0
  %791 = vmatprep.subr.mxu0 0.0
  %792 = vmatpush1.msra.mxu0 0.0
  %793 = vmatprep.subr.mxu0 0.0
  %794 = vmatpush1.msra.mxu0 0.0
  %795 = vmatprep.subr.mxu0 0.0
  %796 = vmatpush1.msra.mxu0 0.0
  %797 = vmatprep.mubr.f32.mxu0 0.0
  %798 = vmatmul.mubr.f32.gmra.mrb[0].mxu0 %v547
  %v799 = vpop.f32.mrb[0].mxu0
  %v800 = vadd.f32 0.0, %v799
  %v801 = vpop.f32.mrb[0].mxu0
  %802 = vmatprep.mubr.f32.mxu0 0.0
  %803 = vmatmul.mubr.f32.gmra.mrb[0].mxu0 %v550
  %v804 = vpop.f32.mrb[0].mxu0
  %v805 = vadd.f32 0.0, %v804
  %v806 = vpop.f32.mrb[0].mxu0
  %807 = vmatprep.mubr.f32.mxu0 0.0
  %808 = vmatmul.mubr.f32.gmra.mrb[0].mxu0 %v553
  %v809 = vpop.f32.mrb[0].mxu0
  %v810 = vadd.f32 0.0, %v809
  %v811 = vpop.f32.mrb[0].mxu0
  %812 = vmatprep.mubr.f32.mxu0 0.0
  %813 = vmatmul.mubr.f32.gmra.mrb[0].mxu0 %v556
  %v814 = vpop.f32.mrb[0].mxu0
  %v815 = vadd.f32 0.0, %v814
  %v816 = vpop.f32.mrb[0].mxu0
  %817 = vdwg.mxu0
  %v818 = vlaneseq
  %v819 = vshrl.u32 %v818, 7
  %v820 = vsub.s32 0, %v819
  %v821 = vrot.slane %v732, %v820
  %822 = vmatprep.subr.mxu0 0.0
  %823 = vmatpush1.msra.mxu0 %v800
  %824 = vmatprep.subr.mxu0 0.0
  %825 = vmatpush1.msra.mxu0 %v805
  %826 = vmatprep.subr.mxu0 0.0
  %827 = vmatpush1.msra.mxu0 %v810
  %828 = vmatprep.subr.mxu0 0.0
  %829 = vmatpush1.msra.mxu0 %v815
  %830 = vmatprep.subr.mxu0 0.0
  %831 = vmatpush1.msra.mxu0 0.0
  %832 = vmatprep.subr.mxu0 0.0
  %833 = vmatpush1.msra.mxu0 0.0
  %834 = vmatprep.subr.mxu0 0.0
  %835 = vmatpush1.msra.mxu0 0.0
  %836 = vmatprep.subr.mxu0 0.0
  %837 = vmatpush1.msra.mxu0 0.0
  %838 = vmatprep.subr.mxu0 0.0
  %839 = vmatpush1.msra.mxu0 0.0
  %840 = vmatprep.subr.mxu0 0.0
  %841 = vmatpush1.msra.mxu0 0.0
  %842 = vmatprep.subr.mxu0 0.0
  %843 = vmatpush1.msra.mxu0 0.0
  %844 = vmatprep.subr.mxu0 0.0
  %845 = vmatpush1.msra.mxu0 0.0
  %846 = vmatprep.subr.mxu0 0.0
  %847 = vmatpush1.msra.mxu0 0.0
  %848 = vmatprep.subr.mxu0 0.0
  %849 = vmatpush1.msra.mxu0 0.0
  %850 = vmatprep.subr.mxu0 0.0
  %851 = vmatpush1.msra.mxu0 0.0
  %852 = vmatprep.subr.mxu0 0.0
  %853 = vmatpush1.msra.mxu0 0.0
  %854 = vmatprep.subr.mxu0 0.0
  %855 = vmatpush1.msra.mxu0 0.0
  %856 = vmatprep.subr.mxu0 0.0
  %857 = vmatpush1.msra.mxu0 0.0
  %858 = vmatprep.subr.mxu0 0.0
  %859 = vmatpush1.msra.mxu0 0.0
  %860 = vmatprep.subr.mxu0 0.0
  %861 = vmatpush1.msra.mxu0 0.0
  %862 = vmatprep.subr.mxu0 0.0
  %863 = vmatpush1.msra.mxu0 0.0
  %864 = vmatprep.subr.mxu0 0.0
  %865 = vmatpush1.msra.mxu0 0.0
  %866 = vmatprep.subr.mxu0 0.0
  %867 = vmatpush1.msra.mxu0 0.0
  %868 = vmatprep.subr.mxu0 0.0
  %869 = vmatpush1.msra.mxu0 0.0
  %870 = vmatprep.subr.mxu0 0.0
  %871 = vmatpush1.msra.mxu0 0.0
  %872 = vmatprep.subr.mxu0 0.0
  %873 = vmatpush1.msra.mxu0 0.0
  %874 = vmatprep.subr.mxu0 0.0
  %875 = vmatpush1.msra.mxu0 0.0
  %876 = vmatprep.subr.mxu0 0.0
  %877 = vmatpush1.msra.mxu0 0.0
  %878 = vmatprep.subr.mxu0 0.0
  %879 = vmatpush1.msra.mxu0 0.0
  %880 = vmatprep.subr.mxu0 0.0
  %881 = vmatpush1.msra.mxu0 0.0
  %882 = vmatprep.subr.mxu0 0.0
  %883 = vmatpush1.msra.mxu0 0.0
  %884 = vmatprep.subr.mxu0 0.0
  %885 = vmatpush1.msra.mxu0 0.0
  %886 = vmatprep.mubr.f32.mxu0 0.0
  %887 = vmatmul.mubr.f32.gmra.mrb[0].mxu0 %v29
  %v888 = vpop.f32.mrb[0].mxu0
  %v889 = vadd.f32 %v821, %v888
  %v890 = vpop.f32.mrb[0].mxu0
  %891 = vmatprep.mubr.f32.mxu0 0.0
  %892 = vmatmul.mubr.f32.gmra.mrb[0].mxu0 %v32
  %v893 = vpop.f32.mrb[0].mxu0
  %v894 = vadd.f32 %v821, %v893
  %v895 = vpop.f32.mrb[0].mxu0
  %896 = vmatprep.mubr.f32.mxu0 0.0
  %897 = vmatmul.mubr.f32.gmra.mrb[0].mxu0 %v35
  %v898 = vpop.f32.mrb[0].mxu0
  %v899 = vadd.f32 %v821, %v898
  %v900 = vpop.f32.mrb[0].mxu0
  %901 = vmatprep.mubr.f32.mxu0 0.0
  %902 = vmatmul.mubr.f32.gmra.mrb[0].mxu0 %v38
  %v903 = vpop.f32.mrb[0].mxu0
  %v904 = vadd.f32 %v821, %v903
  %v905 = vpop.f32.mrb[0].mxu0
  %906 = vdwg.mxu0
  %v907 = vld [vmem:[%s2 + $0xa0] sm:$0xff]
  %v908 = vld [vmem:[%s2 + $0xa8] sm:$0xff]
  %vm909 = vcmask 130048
  %v911 = vsel %vm909, %v889, 0
  %v914 = vsel %vm909, %v894, 0
  %v917 = vsel %vm909, %v899, 0
  %v920 = vsel %vm909, %v904, 0
  %922 = vmatprep.subr.mxu0 0.0
  %923 = vmatpush1.msra.mxu0 %v907
  %924 = vmatprep.subr.mxu0 0.0
  %925 = vmatpush1.msra.mxu0 %v908
  %926 = vmatprep.subr.mxu0 0.0
  %927 = vmatpush1.msra.mxu0 0.0
  %928 = vmatprep.subr.mxu0 0.0
  %929 = vmatpush1.msra.mxu0 0.0
  %930 = vmatprep.subr.mxu0 0.0
  %931 = vmatpush1.msra.mxu0 0.0
  %932 = vmatprep.subr.mxu0 0.0
  %933 = vmatpush1.msra.mxu0 0.0
  %934 = vmatprep.subr.mxu0 0.0
  %935 = vmatpush1.msra.mxu0 0.0
  %936 = vmatprep.subr.mxu0 0.0
  %937 = vmatpush1.msra.mxu0 0.0
  %938 = vmatprep.subr.mxu0 0.0
  %939 = vmatpush1.msra.mxu0 0.0
  %940 = vmatprep.subr.mxu0 0.0
  %941 = vmatpush1.msra.mxu0 0.0
  %942 = vmatprep.subr.mxu0 0.0
  %943 = vmatpush1.msra.mxu0 0.0
  %944 = vmatprep.subr.mxu0 0.0
  %945 = vmatpush1.msra.mxu0 0.0
  %946 = vmatprep.subr.mxu0 0.0
  %947 = vmatpush1.msra.mxu0 0.0
  %948 = vmatprep.subr.mxu0 0.0
  %949 = vmatpush1.msra.mxu0 0.0
  %950 = vmatprep.subr.mxu0 0.0
  %951 = vmatpush1.msra.mxu0 0.0
  %952 = vmatprep.subr.mxu0 0.0
  %953 = vmatpush1.msra.mxu0 0.0
  %954 = vmatprep.subr.mxu0 0.0
  %955 = vmatpush1.msra.mxu0 0.0
  %956 = vmatprep.subr.mxu0 0.0
  %957 = vmatpush1.msra.mxu0 0.0
  %958 = vmatprep.subr.mxu0 0.0
  %959 = vmatpush1.msra.mxu0 0.0
  %960 = vmatprep.subr.mxu0 0.0
  %961 = vmatpush1.msra.mxu0 0.0
  %962 = vmatprep.subr.mxu0 0.0
  %963 = vmatpush1.msra.mxu0 0.0
  %964 = vmatprep.subr.mxu0 0.0
  %965 = vmatpush1.msra.mxu0 0.0
  %966 = vmatprep.subr.mxu0 0.0
  %967 = vmatpush1.msra.mxu0 0.0
  %968 = vmatprep.subr.mxu0 0.0
  %969 = vmatpush1.msra.mxu0 0.0
  %970 = vmatprep.subr.mxu0 0.0
  %971 = vmatpush1.msra.mxu0 0.0
  %972 = vmatprep.subr.mxu0 0.0
  %973 = vmatpush1.msra.mxu0 0.0
  %974 = vmatprep.subr.mxu0 0.0
  %975 = vmatpush1.msra.mxu0 0.0
  %976 = vmatprep.subr.mxu0 0.0
  %977 = vmatpush1.msra.mxu0 0.0
  %978 = vmatprep.subr.mxu0 0.0
  %979 = vmatpush1.msra.mxu0 0.0
  %980 = vmatprep.subr.mxu0 0.0
  %981 = vmatpush1.msra.mxu0 0.0
  %982 = vmatprep.subr.mxu0 0.0
  %983 = vmatpush1.msra.mxu0 0.0
  %984 = vmatprep.subr.mxu0 0.0
  %985 = vmatpush1.msra.mxu0 0.0
  %986 = vmatprep.mubr.f32.mxu0 0.0
  %987 = vmatmul.mubr.f32.gmra.mrb[0].mxu0 %v911
  %v988 = vpop.f32.mrb[0].mxu0
  %v989 = vadd.f32 0.0, %v988
  %v990 = vpop.f32.mrb[0].mxu0
  %991 = vmatprep.mubr.f32.mxu0 0.0
  %992 = vmatmul.mubr.f32.gmra.mrb[0].mxu0 %v914
  %v993 = vpop.f32.mrb[0].mxu0
  %v994 = vadd.f32 0.0, %v993
  %v995 = vpop.f32.mrb[0].mxu0
  %996 = vmatprep.mubr.f32.mxu0 0.0
  %997 = vmatmul.mubr.f32.gmra.mrb[0].mxu0 %v917
  %v998 = vpop.f32.mrb[0].mxu0
  %v999 = vadd.f32 0.0, %v998
  %v1000 = vpop.f32.mrb[0].mxu0
  %1001 = vmatprep.mubr.f32.mxu0 0.0
  %1002 = vmatmul.mubr.f32.gmra.mrb[0].mxu0 %v920
  %v1003 = vpop.f32.mrb[0].mxu0
  %v1004 = vadd.f32 0.0, %v1003
  %v1005 = vpop.f32.mrb[0].mxu0
  %1006 = vdwg.mxu0
  %v1007 = vadd.f32 %v710, %v989
  %v1008 = vadd.f32 %v715, %v994
  %v1009 = vadd.f32 %v720, %v999
  %v1010 = vadd.f32 %v725, %v1004
  %v1011 = vld [vmem:[%s3 + $0x3] sm:$0x1]
  %v1012 = vlaneseq
  %v1013 = vshrl.u32 %v1012, 7
  %v1014 = vsub.s32 0, %v1013
  %v1015 = vrot.slane %v1011, %v1014
  %v1016 = vadd.f32 %v1007, %v1015
  %v1017 = vadd.f32 %v1008, %v1015
  %v1018 = vadd.f32 %v1009, %v1015
  %v1019 = vadd.f32 %v1010, %v1015
  %vm1020 = vcmask 31744
  %1021 = vst.msk [vmem:[%s4] sm:$0xff] %vm1020, %v1016
  %1022 = vst.msk [vmem:[%s4 + $0x8] sm:$0xff] %vm1020, %v1017
  %1023 = vst.msk [vmem:[%s4 + $0x10] sm:$0xff] %vm1020, %v1018
  %1024 = vst.msk [vmem:[%s4 + $0x18] sm:$0xff] %vm1020, %v1019
  // Predicated region
  $region18: #{gconv_module_forward.1} parent=0 // pred_check
    _
  $region19: #{gconv_module_forward.1} parent=0 // pred_check_branch
    %1026 = sbr.rel (0) target = $region21
  $region20: #{gconv_module_forward.1} parent=0 // pred_region
    _
  $region21: #{gconv_module_forward.1} parent=0 // pred_fallthru
    _
  // Predicated region
  $region22: #{gconv_module_forward.1} parent=0 // pred_check
    _
  $region23: #{gconv_module_forward.1} parent=0 // pred_check_branch
    %1028 = sbr.rel (0) target = $region25
  $region24: #{gconv_module_forward.1} parent=0 // pred_region
    _
  $region25: #{gconv_module_forward.1} parent=0 // pred_fallthru
    _

</llo_original>
